<compile_context>
chip_gen: v7x
topology: tpu7x:2x2x1
jax: 0.10.0
libtpu: 0.0.40
codegen_flags: <defaults>
</compile_context>

<pallas_src>
import math
import functools

import numpy as np
import jax
import jax.numpy as jnp
from jax import lax
from jax.experimental import pallas as pl
from jax.experimental.pallas import tpu as pltpu

_NEG_INF = -1e30  # finite: avoids -inf - (-inf) = NaN for fully-masked rows


def _pick_tile(dim, candidates):
    """Largest candidate that evenly divides `dim`; fall back to the full dim."""
    for c in candidates:
        if dim % c == 0:
            return c
    return dim


def _maybe_buffered_spec(shape, index_map, buffers):
    """BlockSpec with deeper pipelining when requested and supported."""
    if buffers and buffers > 2 and hasattr(pl, "Buffered"):
        try:
            return pl.BlockSpec(shape, index_map, pipeline_mode=pl.Buffered(buffers))
        except TypeError:  # older pallas without the pipeline_mode kwarg
            pass
    return pl.BlockSpec(shape, index_map)


def _attn_step(q, k, v, mask_blk, o_ref, m_sc, l_sc, acc_sc, *,
               scale, scale_in_kernel, causal, mask_mode, tq, tk):
    """One (q-tile, kv-tile) flash-attention step.  q:(G,tq,D)  k,v:(G,tk,D)."""
    qi = pl.program_id(1)
    ki = pl.program_id(2)
    nk = pl.num_programs(2)

    @pl.when(ki == 0)
    def _init():
        m_sc[...] = jnp.full_like(m_sc, -jnp.inf)
        l_sc[...] = jnp.zeros_like(l_sc)
        acc_sc[...] = jnp.zeros_like(acc_sc)

    def _compute():
        qv = q
        if scale_in_kernel:  # f32 operand path: fold 1/sqrt(d_k) into q (Sq*D mults)
            qv = qv * jnp.asarray(scale, dtype=qv.dtype)

        # Batched QK^T: contract last dim of both operands -> no K transpose / XLU work.
        s = jnp.einsum("gqd,gkd->gqk", qv, k, preferred_element_type=jnp.float32)

        if mask_mode in ("row", "full"):
            # compact int8 mask -> additive f32 bias on the VPU (broadcasts over G / q rows)
            s = s + jnp.where(mask_blk == 0, jnp.float32(_NEG_INF), jnp.float32(0.0))
        if causal:
            rows = qi * tq + lax.broadcasted_iota(jnp.int32, (tq, tk), 0)
            cols = ki * tk + lax.broadcasted_iota(jnp.int32, (tq, tk), 1)
            s = jnp.where(rows >= cols, s, jnp.float32(_NEG_INF))

        m_prev = m_sc[...]
        m_new = jnp.maximum(m_prev, jnp.max(s, axis=-1, keepdims=True))
        alpha = jnp.exp(m_prev - m_new)
        p = jnp.exp(s - m_new)
        l_sc[...] = alpha * l_sc[...] + jnp.sum(p, axis=-1, keepdims=True)
        acc_sc[...] = alpha * acc_sc[...] + jnp.einsum(
            "gqk,gkd->gqd", p.astype(v.dtype), v, preferred_element_type=jnp.float32)
        m_sc[...] = m_new

    if causal:
        # Skip kv tiles that lie entirely above the diagonal (first key index of the
        # tile > last query index of the q tile).  k/v DMAs still stream, but all
        # MXU/EUP/VPU work for ~half of the tiles is elided.
        @pl.when((ki * tk) <= (qi * tq + (tq - 1)))
        def _():
            _compute()
    else:
        _compute()

    @pl.when(ki == nk - 1)
    def _finish():
        # Deferred normalization: one reciprocal per row instead of an Sq x Skv divide.
        inv_l = pl.reciprocal(l_sc[...], approx=False)
        o_ref[...] = (acc_sc[...] * inv_l).astype(o_ref.dtype)


def _sdpa_kernel(q_ref, k_ref, v_ref, o_ref, m_sc, l_sc, acc_sc, *,
                 scale, scale_in_kernel, causal, mask_mode, tq, tk):
    _attn_step(q_ref[...], k_ref[...], v_ref[...], None, o_ref, m_sc, l_sc, acc_sc,
               scale=scale, scale_in_kernel=scale_in_kernel, causal=causal,
               mask_mode="none", tq=tq, tk=tk)


def _sdpa_masked_kernel(q_ref, k_ref, v_ref, m_ref, o_ref, m_sc, l_sc, acc_sc, *,
                        scale, scale_in_kernel, causal, mask_mode, tq, tk):
    if mask_mode == "row":
        # Resident (1, 1, Skv) int8 row: slice the current kv tile in-kernel (no per-step DMA).
        ki = pl.program_id(2)
        off = pl.multiple_of(ki * tk, tk)
        mask_blk = m_ref[:, :, pl.ds(off, tk)]
    else:  # "full": streamed (1, tq, tk) int8 score-mask block
        mask_blk = m_ref[...]
    _attn_step(q_ref[...], k_ref[...], v_ref[...], mask_blk, o_ref, m_sc, l_sc, acc_sc,
               scale=scale, scale_in_kernel=scale_in_kernel, causal=causal,
               mask_mode=mask_mode, tq=tq, tk=tk)


def _flash_attention(q, k, v, mask, B, H, *, causal, scale_in_kernel, scale, out_dtype):
    """q,k,v: (B*H, S, D) in compute dtype; mask: None or compact (mb, mq, Skv) int8."""
    BH, Sq, D = q.shape
    Skv = k.shape[1]
    itemsize = jnp.dtype(q.dtype).itemsize
    out_itemsize = jnp.dtype(out_dtype).itemsize

    tq = _pick_tile(Sq, (256, 128, 64, 32, 16, 8))
    tk = _pick_tile(Skv, (512, 256, 128))
    nk = Skv // tk
    kv_buffers = 3 if nk >= 3 else 2  # deeper kv pipelining only when the loop is long enough

    # Heads-per-step fold for tiny per-head tiles: amortize the ~0.35us/step pipeline
    # overhead, but keep the first grid axis >= 2 so both v7x TensorCores have work,
    # and keep the folded blocks well under the VMEM budget.
    G = 1
    if Sq <= 128 and Skv <= 128 and D <= 128:
        per_head = ((tq * D + 2 * tk * D) * itemsize * 2
                    + tq * D * out_itemsize * 2
                    + tq * max(D, 128) * 4 + 2 * tq * 128 * 4)
        for g in range(H, 0, -1):
            if H % g:
                continue
            if g * per_head > (12 << 20):
                continue
            if g > 1 and (B * H) // g < 2 and B * H >= 2:
                continue
            G = g
            break

    grid = (BH // G, Sq // tq, Skv // tk)

    q_idx = lambda g, qi, ki: (g, qi, 0)
    kv_idx = lambda g, qi, ki: (g, ki, 0)

    in_specs = [
        pl.BlockSpec((G, tq, D), q_idx),
        _maybe_buffered_spec((G, tk, D), kv_idx, kv_buffers),
        _maybe_buffered_spec((G, tk, D), kv_idx, kv_buffers),
    ]
    args = [q, k, v]

    mask_mode = "none"
    mask_bytes = 0
    if mask is not None:
        mb, mq, _ = mask.shape
        if mq == 1:
            mask_mode = "row"  # key-padding mask: one resident compact row per batch-head block

            def mask_idx(g, qi, ki, _mb=mb):
                return ((g * G) // H if _mb > 1 else 0, 0, 0)

            in_specs.append(pl.BlockSpec((1, 1, Skv), mask_idx))
            mask_bytes = 2 * Skv
        else:
            mask_mode = "full"  # arbitrary (non-causal) score mask, streamed int8

            def mask_idx(g, qi, ki, _mb=mb):
                return ((g * G) // H if _mb > 1 else 0, qi, ki)

            in_specs.append(_maybe_buffered_spec((1, tq, tk), mask_idx, kv_buffers))
            mask_bytes = kv_buffers * tq * tk
        args.append(mask)

    common = dict(scale=scale, scale_in_kernel=scale_in_kernel, causal=causal,
                  mask_mode=mask_mode, tq=tq, tk=tk)
    kernel = functools.partial(
        _sdpa_kernel if mask_mode == "none" else _sdpa_masked_kernel, **common)

    out_spec = pl.BlockSpec((G, tq, D), q_idx)

    # Explicit scoped-VMEM budget from block/buffer sizes + scratch + score temporaries,
    # capped at ~75% of the physical per-core VMEM (v7x has only 64 MiB).
    vmem = 2 * G * tq * D * itemsize                       # q blocks (double-buffered)
    vmem += 2 * G * tq * D * out_itemsize                  # out blocks
    vmem += 2 * kv_buffers * G * tk * D * itemsize         # k + v blocks
    vmem += mask_bytes
    vmem += (2 * G * tq * 128 + G * tq * max(D, 128)) * 4  # m, l, acc scratch (lane-padded)
    vmem += 3 * G * tq * tk * 4                            # s / p temporaries headroom
    vmem_limit = vmem + (8 << 20)
    cap = 48 << 20
    try:
        cap = int(pltpu.get_tpu_info().vmem_capacity_bytes * 3 // 4)
    except Exception:
        pass
    vmem_limit = int(min(max(vmem_limit, 16 << 20), cap))

    return pl.pallas_call(
        kernel,
        out_shape=jax.ShapeDtypeStruct((BH, Sq, D), out_dtype),
        grid_spec=pltpu.PrefetchScalarGridSpec(
            num_scalar_prefetch=0,
            grid=grid,
            in_specs=in_specs,
            out_specs=out_spec,
            scratch_shapes=[
                pltpu.VMEM((G, tq, 1), jnp.float32),   # running row-max m
                pltpu.VMEM((G, tq, 1), jnp.float32),   # running row-sum l
                pltpu.VMEM((G, tq, D), jnp.float32),   # unnormalized output acc
            ],
        ),
        compiler_params=pltpu.CompilerParams(
            dimension_semantics=("parallel", "parallel", "arbitrary"),
            vmem_limit_bytes=vmem_limit,
        ),
    )(*args)


@functools.partial(jax.jit, static_argnames=("causal", "compute_dtype"))
def _sdpa_jit(q, k, v, mask, *, causal, compute_dtype):
    B, H, Sq, D = q.shape
    Skv = k.shape[2]
    scale = 1.0 / math.sqrt(D)
    out_dtype = q.dtype

    q3 = q.reshape(B * H, Sq, D)
    k3 = k.reshape(B * H, Skv, D)
    v3 = v.reshape(B * H, Skv, D)

    scale_in_kernel = True
    if jnp.dtype(compute_dtype) != q.dtype:
        # Cast MXU operands in the wrapper (halves DMA bytes + block footprint) and fold
        # 1/sqrt(d_k) into the same elementwise pass, so the kernel does no per-step q work.
        q3 = (q3 * jnp.asarray(scale, q3.dtype)).astype(compute_dtype)
        k3 = k3.astype(compute_dtype)
        v3 = v3.astype(compute_dtype)
        scale_in_kernel = False

    mask_c = None
    if mask is not None:
        mb, mq, mk = mask.shape
        m8 = (mask != 0).astype(jnp.int8)   # compact int8 mask in HBM (4x less than f32 bias)
        if mk != Skv:                       # rare 1-wide kv mask: expand to full kv extent
            m8 = jnp.broadcast_to(m8, (mb, mq, Skv))
        mask_c = m8

    out = _flash_attention(q3, k3, v3, mask_c, B, H, causal=causal,
                           scale_in_kernel=scale_in_kernel, scale=scale,
                           out_dtype=out_dtype)
    return out.reshape(B, H, Sq, D)


def scaled_dot_product_attention(q, k, v, mask=None, *, is_causal=None, mxu_dtype="auto"):
    """JAX/Pallas equivalent of ScaledDotProductAttention.forward (use_dropout=False).

    q: (B, H, Sq, D); k, v: (B, H, Skv, D)
    mask (optional): (B, 1, Sq) | (B, 1, Skv) | (1, Skv, Skv)  -- PyTorch-module convention.
    is_causal: True -> generate the causal mask in-kernel (mask arg ignored); None -> auto-
               detect concrete (1,S,S) lower-triangular masks; False -> never.
    mxu_dtype: "auto" (default) casts f32 operands to bf16 for full MXU rate and half the
               DMA traffic (softmax stats / accumulation stay f32); None keeps the input
               dtype for bit-closer numerics; or pass an explicit dtype.
    """
    B, H, Sq, D = q.shape
    Skv = k.shape[2]

    if mxu_dtype == "auto":
        compute_dtype = jnp.dtype(jnp.bfloat16) if q.dtype == jnp.float32 else jnp.dtype(q.dtype)
    elif mxu_dtype is None:
        compute_dtype = jnp.dtype(q.dtype)
    else:
        compute_dtype = jnp.dtype(mxu_dtype)

    causal = bool(is_causal) if is_causal is not None else False
    if mask is not None:
        assert mask.ndim == 3, "mask must be 3-D as in the PyTorch module"
        mb, mq, mk = mask.shape
        assert mb in (1, B) and mq in (1, Sq) and mk in (1, Skv), \
            f"mask shape {mask.shape} not broadcastable to ({B}, {Sq}, {Skv})"
        if (is_causal is None and mb == 1 and mq == Sq and mk == Skv and Sq == Skv
                and Sq * Skv <= (4096 * 4096)):
            try:  # concrete mask only; inside a user jit this raises and we fall through
                m_np = np.asarray(jax.device_get(mask)) != 0
                if np.array_equal(m_np[0], np.tril(np.ones((Sq, Skv), dtype=bool))):
                    causal = True
            except Exception:
                pass
    if causal:
        mask = None  # generated in-kernel from iota: zero mask HBM traffic

    return _sdpa_jit(q, k, v, mask, causal=causal, compute_dtype=compute_dtype)


def _reference(q, k, v, mask=None):
    d_k = k.shape[-1]
    s = jnp.einsum("bhqd,bhkd->bhqk", q, k) / math.sqrt(d_k)
    if mask is not None:
        s = jnp.where(mask[:, None] == 0, -jnp.inf, s)
    p = jax.nn.softmax(s, axis=-1)
    return jnp.einsum("bhqk,bhkd->bhqd", p, v)


if __name__ == "__main__":
    keys = jax.random.split(jax.random.PRNGKey(0), 12)

    # --- tiny module-like shapes (B=2, H=4, S=8, D=32): heads-folded path ---
    B, H, S, D = 2, 4, 8, 32
    q = jax.random.normal(keys[0], (B, H, S, D), dtype=jnp.float32)
    k = jax.random.normal(keys[1], (B, H, S, D), dtype=jnp.float32)
    v = jax.random.normal(keys[2], (B, H, S, D), dtype=jnp.float32)
    pad = (jax.random.uniform(keys[3], (B, 1, S)) > 0.3).astype(jnp.int32)
    pad = pad.at[:, :, 0].set(1)   # at least one unmasked key per row

    out = scaled_dot_product_attention(q, k, v)                    # default: bf16 MXU operands
    jax.block_until_ready(out)
    assert jnp.allclose(out, _reference(q, k, v), atol=5e-2, rtol=5e-2)

    out_m = scaled_dot_product_attention(q, k, v, pad)
    jax.block_until_ready(out_m)
    assert jnp.allclose(out_m, _reference(q, k, v, pad), atol=5e-2, rtol=5e-2)

    out_f32 = scaled_dot_product_attention(q, k, v, pad, mxu_dtype=None)   # exact f32 path
    jax.block_until_ready(out_f32)
    assert jnp.allclose(out_f32, _reference(q, k, v, pad), atol=1e-5, rtol=1e-5)

    # --- causal (1,S,S) mask: auto-detected, generated in-kernel, multi kv tile ---
    B2, H2, S2, D2 = 1, 2, 384, 64
    q2 = jax.random.normal(keys[4], (B2, H2, S2, D2), dtype=jnp.float32)
    k2 = jax.random.normal(keys[5], (B2, H2, S2, D2), dtype=jnp.float32)
    v2 = jax.random.normal(keys[6], (B2, H2, S2, D2), dtype=jnp.float32)
    causal_mask = jnp.tril(jnp.ones((S2, S2), dtype=jnp.int32))[None]   # (1, S, S)

    out2 = scaled_dot_product_attention(q2, k2, v2, causal_mask, mxu_dtype=None)
    jax.block_until_ready(out2)
    assert jnp.allclose(out2, _reference(q2, k2, v2, causal_mask), atol=1e-4, rtol=1e-4)

    out2b = scaled_dot_product_attention(q2, k2, v2, causal_mask)        # bf16 default
    jax.block_until_ready(out2b)
    assert jnp.allclose(out2b, _reference(q2, k2, v2, causal_mask), atol=1e-1, rtol=1e-1)

    # --- (B,1,Skv) key-padding mask: resident int8 row + in-kernel pl.ds slicing ---
    pad2 = (jax.random.uniform(keys[7], (B2, 1, S2)) > 0.2).astype(jnp.int32)
    pad2 = pad2.at[:, :, 0].set(1)
    out3 = scaled_dot_product_attention(q2, k2, v2, pad2, mxu_dtype=None)
    jax.block_until_ready(out3)
    assert jnp.allclose(out3, _reference(q2, k2, v2, pad2), atol=1e-4, rtol=1e-4)

    # --- arbitrary non-causal (1,S,S) score mask: streamed int8 mask path ---
    S3 = 256
    q4 = jax.random.normal(keys[8], (1, 2, S3, D2), dtype=jnp.float32)
    k4 = jax.random.normal(keys[9], (1, 2, S3, D2), dtype=jnp.float32)
    v4 = jax.random.normal(keys[10], (1, 2, S3, D2), dtype=jnp.float32)
    sm = (jax.random.uniform(keys[11], (1, S3, S3)) > 0.4).astype(jnp.int32)
    sm = sm.at[:, :, 0].set(1)
    out4 = scaled_dot_product_attention(q4, k4, v4, sm, mxu_dtype=None)
    jax.block_until_ready(out4)
    assert jnp.allclose(out4, _reference(q4, k4, v4, sm), atol=1e-4, rtol=1e-4)

    print("KERNEL_OK")
</pallas_src>

<mosaic_0001>
module attributes {stable_mosaic.version = 11 : i64} {
  func.func @_sdpa_kernel(%arg0: i32, %arg1: i32, %arg2: i32, %arg3: memref<4x8x32xbf16, #tpu.memory_space<vmem>>, %arg4: memref<4x8x32xbf16, #tpu.memory_space<vmem>>, %arg5: memref<4x8x32xbf16, #tpu.memory_space<vmem>>, %arg6: memref<4x8x32xf32, #tpu.memory_space<vmem>>, %arg7: memref<4x8x1xf32, #tpu.memory_space<vmem>>, %arg8: memref<4x8x1xf32, #tpu.memory_space<vmem>>, %arg9: memref<4x8x32xf32, #tpu.memory_space<vmem>>) attributes {dimension_semantics = [#tpu.dimension_semantics<parallel>, #tpu.dimension_semantics<parallel>, #tpu.dimension_semantics<arbitrary>], iteration_bounds = array<i64: 2, 1, 1>, scalar_prefetch = 0 : i64, scratch_operands = 3 : i64, tpu.core_type = #tpu.core_type<tc>, window_params = [{transform_indices = @transform_0, window_bounds = array<i64: 4, 8, 32>}, {transform_indices = @transform_1, window_bounds = array<i64: 4, 8, 32>}, {transform_indices = @transform_2, window_bounds = array<i64: 4, 8, 32>}, {transform_indices = @transform_3, window_bounds = array<i64: 4, 8, 32>}]} {
    %c0 = arith.constant 0 : index
    %c0_0 = arith.constant 0 : index
    %c0_1 = arith.constant 0 : index
    %0 = vector.load %arg3[%c0, %c0_0, %c0_1] : memref<4x8x32xbf16, #tpu.memory_space<vmem>>, vector<4x8x32xbf16>
    %c0_2 = arith.constant 0 : index
    %c0_3 = arith.constant 0 : index
    %c0_4 = arith.constant 0 : index
    %1 = vector.load %arg4[%c0_2, %c0_3, %c0_4] : memref<4x8x32xbf16, #tpu.memory_space<vmem>>, vector<4x8x32xbf16>
    %c0_5 = arith.constant 0 : index
    %c0_6 = arith.constant 0 : index
    %c0_7 = arith.constant 0 : index
    %2 = vector.load %arg5[%c0_5, %c0_6, %c0_7] : memref<4x8x32xbf16, #tpu.memory_space<vmem>>, vector<4x8x32xbf16>
    %c0_i32 = arith.constant 0 : i32
    %3 = arith.cmpi eq, %arg2, %c0_i32 : i32
    %4 = arith.extui %3 : i1 to i32
    %c0_i32_8 = arith.constant 0 : i32
    %5 = arith.cmpi ne, %4, %c0_i32_8 : i32
    scf.if %5 {
      %cst_32 = arith.constant 0xFF800000 : f32
      %33 = vector.broadcast %cst_32 : f32 to vector<4x8x1xf32>
      %c0_33 = arith.constant 0 : index
      %c0_34 = arith.constant 0 : index
      %c0_35 = arith.constant 0 : index
      %34 = vector.load %arg7[%c0_33, %c0_34, %c0_35] : memref<4x8x1xf32, #tpu.memory_space<vmem>>, vector<4x8x1xf32>
      tpu.vector_store %arg7[%c0_33, %c0_34, %c0_35], %33 {strides = array<i32>} : memref<4x8x1xf32, #tpu.memory_space<vmem>>, vector<4x8x1xf32>,
      %cst_36 = arith.constant 0.000000e+00 : f32
      %35 = vector.broadcast %cst_36 : f32 to vector<4x8x1xf32>
      %c0_37 = arith.constant 0 : index
      %c0_38 = arith.constant 0 : index
      %c0_39 = arith.constant 0 : index
      %36 = vector.load %arg8[%c0_37, %c0_38, %c0_39] : memref<4x8x1xf32, #tpu.memory_space<vmem>>, vector<4x8x1xf32>
      tpu.vector_store %arg8[%c0_37, %c0_38, %c0_39], %35 {strides = array<i32>} : memref<4x8x1xf32, #tpu.memory_space<vmem>>, vector<4x8x1xf32>,
      %cst_40 = arith.constant 0.000000e+00 : f32
      %37 = vector.broadcast %cst_40 : f32 to vector<4x8x32xf32>
      %c0_41 = arith.constant 0 : index
      %c0_42 = arith.constant 0 : index
      %c0_43 = arith.constant 0 : index
      %38 = vector.load %arg9[%c0_41, %c0_42, %c0_43] : memref<4x8x32xf32, #tpu.memory_space<vmem>>, vector<4x8x32xf32>
      tpu.vector_store %arg9[%c0_41, %c0_42, %c0_43], %37 {strides = array<i32>} : memref<4x8x32xf32, #tpu.memory_space<vmem>>, vector<4x8x32xf32>,
    } else {
    }
    "tpu.trace_start"() <{level = 10 : i32, message = "gqd,gkd->gqk"}> : () -> ()
    %cst = arith.constant dense<0.000000e+00> : vector<4x8x8xf32>
    %6 = tpu.matmul %0, %1, %cst {dimension_numbers = #tpu.dot_dimension_numbers<[2], [2], [1], [1], [0, 0, 0, 1, 1, 1], [0], [0]>} : vector<4x8x32xbf16>, vector<4x8x32xbf16>, vector<4x8x8xf32> -> vector<4x8x8xf32>
    "tpu.trace_stop"() : () -> ()
    %c0_9 = arith.constant 0 : index
    %c0_10 = arith.constant 0 : index
    %c0_11 = arith.constant 0 : index
    %7 = vector.load %arg7[%c0_9, %c0_10, %c0_11] : memref<4x8x1xf32, #tpu.memory_space<vmem>>, vector<4x8x1xf32>
    %cst_12 = arith.constant dense<0xFF800000> : vector<4x8xf32>
    %8 = vector.multi_reduction <maximumf>, %6, %cst_12 [2] : vector<4x8x8xf32> to vector<4x8xf32>
    %9 = vector.shape_cast %8 : vector<4x8xf32> to vector<4x8x1xf32>
    %10 = arith.maximumf %7, %9 : vector<4x8x1xf32>
    %11 = arith.subf %7, %10 : vector<4x8x1xf32>
    %12 = math.exp %11 : vector<4x8x1xf32>
    %13 = vector.broadcast %10 : vector<4x8x1xf32> to vector<4x8x8xf32>
    %14 = arith.subf %6, %13 : vector<4x8x8xf32>
    %15 = math.exp %14 : vector<4x8x8xf32>
    %c0_13 = arith.constant 0 : index
    %c0_14 = arith.constant 0 : index
    %c0_15 = arith.constant 0 : index
    %16 = vector.load %arg8[%c0_13, %c0_14, %c0_15] : memref<4x8x1xf32, #tpu.memory_space<vmem>>, vector<4x8x1xf32>
    %17 = arith.mulf %12, %16 : vector<4x8x1xf32>
    %cst_16 = arith.constant dense<0.000000e+00> : vector<4x8xf32>
    %18 = vector.multi_reduction <add>, %15, %cst_16 [2] : vector<4x8x8xf32> to vector<4x8xf32>
    %19 = vector.shape_cast %18 : vector<4x8xf32> to vector<4x8x1xf32>
    %20 = arith.addf %17, %19 : vector<4x8x1xf32>
    %c0_17 = arith.constant 0 : index
    %c0_18 = arith.constant 0 : index
    %c0_19 = arith.constant 0 : index
    %21 = vector.load %arg8[%c0_17, %c0_18, %c0_19] : memref<4x8x1xf32, #tpu.memory_space<vmem>>, vector<4x8x1xf32>
    tpu.vector_store %arg8[%c0_17, %c0_18, %c0_19], %20 {strides = array<i32>} : memref<4x8x1xf32, #tpu.memory_space<vmem>>, vector<4x8x1xf32>,
    %c0_20 = arith.constant 0 : index
    %c0_21 = arith.constant 0 : index
    %c0_22 = arith.constant 0 : index
    %22 = vector.load %arg9[%c0_20, %c0_21, %c0_22] : memref<4x8x32xf32, #tpu.memory_space<vmem>>, vector<4x8x32xf32>
    %23 = vector.broadcast %12 : vector<4x8x1xf32> to vector<4x8x32xf32>
    %24 = arith.mulf %23, %22 : vector<4x8x32xf32>
    %25 = arith.truncf %15 : vector<4x8x8xf32> to vector<4x8x8xbf16>
    "tpu.trace_start"() <{level = 10 : i32, message = "gqk,gkd->gqd"}> : () -> ()
    %cst_23 = arith.constant dense<0.000000e+00> : vector<4x8x32xf32>
    %26 = tpu.matmul %25, %2, %cst_23 {dimension_numbers = #tpu.dot_dimension_numbers<[2], [1], [1], [2], [0, 0, 0, 1, 1, 2], [0], [0]>} : vector<4x8x8xbf16>, vector<4x8x32xbf16>, vector<4x8x32xf32> -> vector<4x8x32xf32>
    "tpu.trace_stop"() : () -> ()
    %27 = arith.addf %24, %26 : vector<4x8x32xf32>
    %c0_24 = arith.constant 0 : index
    %c0_25 = arith.constant 0 : index
    %c0_26 = arith.constant 0 : index
    %28 = vector.load %arg9[%c0_24, %c0_25, %c0_26] : memref<4x8x32xf32, #tpu.memory_space<vmem>>, vector<4x8x32xf32>
    tpu.vector_store %arg9[%c0_24, %c0_25, %c0_26], %27 {strides = array<i32>} : memref<4x8x32xf32, #tpu.memory_space<vmem>>, vector<4x8x32xf32>,
    %c0_27 = arith.constant 0 : index
    %c0_28 = arith.constant 0 : index
    %c0_29 = arith.constant 0 : index
    %29 = vector.load %arg7[%c0_27, %c0_28, %c0_29] : memref<4x8x1xf32, #tpu.memory_space<vmem>>, vector<4x8x1xf32>
    tpu.vector_store %arg7[%c0_27, %c0_28, %c0_29], %10 {strides = array<i32>} : memref<4x8x1xf32, #tpu.memory_space<vmem>>, vector<4x8x1xf32>,
    %c0_i32_30 = arith.constant 0 : i32
    %30 = arith.cmpi eq, %arg2, %c0_i32_30 : i32
    %31 = arith.extui %30 : i1 to i32
    %c0_i32_31 = arith.constant 0 : i32
    %32 = arith.cmpi ne, %31, %c0_i32_31 : i32
    scf.if %32 {
      %c0_32 = arith.constant 0 : index
      %c0_33 = arith.constant 0 : index
      %c0_34 = arith.constant 0 : index
      %33 = vector.load %arg8[%c0_32, %c0_33, %c0_34] : memref<4x8x1xf32, #tpu.memory_space<vmem>>, vector<4x8x1xf32>
      %34 = tpu.reciprocal %33 : vector<4x8x1xf32> -> vector<4x8x1xf32>
      %c0_35 = arith.constant 0 : index
      %c0_36 = arith.constant 0 : index
      %c0_37 = arith.constant 0 : index
      %35 = vector.load %arg9[%c0_35, %c0_36, %c0_37] : memref<4x8x32xf32, #tpu.memory_space<vmem>>, vector<4x8x32xf32>
      %36 = vector.broadcast %34 : vector<4x8x1xf32> to vector<4x8x32xf32>
      %37 = arith.mulf %35, %36 : vector<4x8x32xf32>
      %c0_38 = arith.constant 0 : index
      %c0_39 = arith.constant 0 : index
      %c0_40 = arith.constant 0 : index
      %38 = vector.load %arg6[%c0_38, %c0_39, %c0_40] : memref<4x8x32xf32, #tpu.memory_space<vmem>>, vector<4x8x32xf32>
      tpu.vector_store %arg6[%c0_38, %c0_39, %c0_40], %37 {strides = array<i32>} : memref<4x8x32xf32, #tpu.memory_space<vmem>>, vector<4x8x32xf32>,
    } else {
    }
    return
  }
  func.func @transform_0(%arg0: i32, %arg1: i32, %arg2: i32) -> (i32, i32, i32) {
    %c0_i32 = arith.constant 0 : i32
    %c0_i32_0 = arith.constant 0 : i32
    return %arg0, %arg1, %c0_i32 : i32, i32, i32
  }
  func.func @transform_1(%arg0: i32, %arg1: i32, %arg2: i32) -> (i32, i32, i32) {
    %c0_i32 = arith.constant 0 : i32
    %c0_i32_0 = arith.constant 0 : i32
    return %arg0, %arg2, %c0_i32 : i32, i32, i32
  }
  func.func @transform_2(%arg0: i32, %arg1: i32, %arg2: i32) -> (i32, i32, i32) {
    %c0_i32 = arith.constant 0 : i32
    %c0_i32_0 = arith.constant 0 : i32
    return %arg0, %arg2, %c0_i32 : i32, i32, i32
  }
  func.func @transform_3(%arg0: i32, %arg1: i32, %arg2: i32) -> (i32, i32, i32) {
    %c0_i32 = arith.constant 0 : i32
    %c0_i32_0 = arith.constant 0 : i32
    return %arg0, %arg1, %c0_i32 : i32, i32, i32
  }
}

</mosaic_0001>

<llo_original>
// kernel: _sdpa_jit.1
$region0: #{_sdpa_jit.1}
  #allocation0 [shape = 'u32[]', space=smem, size = 0x4, offset = 0x4, fixed_abs, tag = 'smem constant byte address 0x4 - core index']
  #allocation1 [shape = 'u32[144,128]{1,0:T(1,128)}', space=vmem, size = 0x12000, scoped, tag = 'internal scratch']
  #allocation2 [shape = 'f32[4,8,1]{2,1,0:T(8,128)}', space=vmem, size = 0x4000, scoped, tag = 'scratch operand']
  #allocation3 [shape = 'f32[4,8,1]{2,1,0:T(8,128)}', space=vmem, size = 0x4000, scoped, tag = 'scratch operand']
  #allocation4 [shape = 'f32[4,8,32]{2,1,0:T(8,128)}', space=vmem, size = 0x4000, scoped, tag = 'scratch operand']
  %s0 = inlined_call_operand.vmem [shape: bf16[8,8,32], index: 0, kind: input, shape index: {}]
  %s1 = inlined_call_operand.vmem [shape: bf16[8,8,32], index: 1, kind: input, shape index: {}]
  %s2 = inlined_call_operand.vmem [shape: bf16[8,8,32], index: 2, kind: input, shape index: {}]
  %s3 = inlined_call_operand.hbm [shape: f32[8,8,32], index: 3, kind: output, shape index: {}]
  %s4 = sld [smem:[#allocation0]]
  $region53: #{_sdpa_jit.1} parent=0
    _
  %s6 = ssub.s32 1, %s4
  %s7 = scalar_select 0, %s6, %s4
  $region1: #{_sdpa_jit.1} parent=0
    #allocation5 [shape = 'u8[32768]{0}', space=vmem, size = 0x8000, scoped, tag = 'output window, operand 0']
    #allocation6 [shape = 's32[2]{0}', space=sflag, size = 0x8, scoped, tag = 'scoped memory for _sdpa_jit.1']
    %8 = vsyncpa [#allocation6], 0
    %s9 = scalar_lea.sflag [#allocation6], 1
    %10 = vsyncpa %s9, 0
    loop: start=0, step=1, limit=4
    $region2: #{_sdpa_jit.1} parent=1 // loop_pre_header
      _
    $region3: #{_sdpa_jit.1} parent=1 // loop_header
      %s12 = sphi 0, %s16
      %p13 = scmp.ge.s32.totalorder %s12, 4
      %s19 = sphi 0, %s38
      %s20 = sphi 0, %s34
      %s21 = sphi 0, %s30
      %s22 = sphi 0, %s19
      %s23 = sphi 0, %s20
      %s24 = sphi 0, %s21
      %s25 = sphi 0, %s22
      %s26 = sphi 0, %s23
      %s27 = sphi 0, %s24
      %s43 = sphi 0, %s45
      %s46 = sphi 0, %s43
      %s47 = sphi 0, %s46
      %s63 = sphi 0, %s47
      %s71 = sphi 0, %s73
      %s74 = sphi 0, %s71
      %s75 = sphi 0, %s74
      %s91 = sphi 0, %s75
      %s99 = sphi 0, %s101
      %s102 = sphi 0, %s99
      %s103 = sphi 0, %s102
      %s119 = sphi 0, %s103
      %s127 = sphi 0, %s129
      %s130 = sphi 0, %s127
      %s131 = sphi 0, %s130
      %s147 = sphi 0, %s131
    $region4: #{_sdpa_jit.1} parent=1 // loop_header_branch
      %15 = sbr.rel (%p13) target = $region8
    $region5: #{_sdpa_jit.1} parent=1 // loop_body
      %s17 = ssub.s32 %s12, 1
      %s18 = ssub.s32 %s12, 2
      %s28 = sadd.s32 1, %s21
      %p29 = scmp.ge.s32.totalorder %s28, 1
      %s30 = scalar_select %p29, 0, %s28
      %s31 = sadd.s32 1, %s20
      %s32 = scalar_select %p29, %s31, %s20
      %p33 = scmp.ge.s32.totalorder %s32, 1
      %s34 = scalar_select %p33, 0, %s32
      %s35 = sadd.s32 1, %s19
      %s36 = scalar_select %p33, %s35, %s19
      %p37 = scmp.ge.s32.totalorder %s36, 2
      %s38 = scalar_select %p37, 0, %s36
      %s39 = ssub.s32 %s19, %s38
      %s40 = ssub.s32 %s20, %s34
      %s41 = sor.u32 %s39, %s40
      %p42 = scmp.eq.s32.totalorder %s41, 0
      %s44 = sadd.s32 %s43, 1
      %s45 = scalar_select %p42, %s43, %s44
      %p48 = pneg %p42
      %p49 = scmp.eq.s32.totalorder %s12, 1
      %p50 = por %p48, %p49
      %p51 = scmp.ne.s32.totalorder %s43, %s46
      %p52 = scmp.eq.s32.totalorder %s12, 0
      %p53 = por %p51, %p52
      %p54 = scmp.ne.s32.totalorder %s43, %s46
      %p55 = scmp.eq.s32.totalorder %s17, 1
      %p56 = por %p54, %p55
      %p57 = scmp.ne.s32.totalorder %s46, %s47
      %p58 = scmp.eq.s32.totalorder %s17, 0
      %p59 = por %p57, %p58
      %p60 = scmp.ne.s32.totalorder %s46, %s47
      %p61 = scmp.eq.s32.totalorder %s18, 1
      %p62 = por %p60, %p61
      %p64 = scmp.ne.s32.totalorder %s47, %s63
      %p65 = scmp.eq.s32.totalorder %s18, 0
      %p66 = por %p64, %p65
      %s67 = ssub.s32 %s19, %s38
      %s68 = ssub.s32 %s21, %s30
      %s69 = sor.u32 %s67, %s68
      %p70 = scmp.eq.s32.totalorder %s69, 0
      %s72 = sadd.s32 %s71, 1
      %s73 = scalar_select %p70, %s71, %s72
      %p76 = pneg %p70
      %p77 = scmp.eq.s32.totalorder %s12, 1
      %p78 = por %p76, %p77
      %p79 = scmp.ne.s32.totalorder %s71, %s74
      %p80 = scmp.eq.s32.totalorder %s12, 0
      %p81 = por %p79, %p80
      %p82 = scmp.ne.s32.totalorder %s71, %s74
      %p83 = scmp.eq.s32.totalorder %s17, 1
      %p84 = por %p82, %p83
      %p85 = scmp.ne.s32.totalorder %s74, %s75
      %p86 = scmp.eq.s32.totalorder %s17, 0
      %p87 = por %p85, %p86
      %p88 = scmp.ne.s32.totalorder %s74, %s75
      %p89 = scmp.eq.s32.totalorder %s18, 1
      %p90 = por %p88, %p89
      %p92 = scmp.ne.s32.totalorder %s75, %s91
      %p93 = scmp.eq.s32.totalorder %s18, 0
      %p94 = por %p92, %p93
      %s95 = ssub.s32 %s19, %s38
      %s96 = ssub.s32 %s21, %s30
      %s97 = sor.u32 %s95, %s96
      %p98 = scmp.eq.s32.totalorder %s97, 0
      %s100 = sadd.s32 %s99, 1
      %s101 = scalar_select %p98, %s99, %s100
      %p104 = pneg %p98
      %p105 = scmp.eq.s32.totalorder %s12, 1
      %p106 = por %p104, %p105
      %p107 = scmp.ne.s32.totalorder %s99, %s102
      %p108 = scmp.eq.s32.totalorder %s12, 0
      %p109 = por %p107, %p108
      %p110 = scmp.ne.s32.totalorder %s99, %s102
      %p111 = scmp.eq.s32.totalorder %s17, 1
      %p112 = por %p110, %p111
      %p113 = scmp.ne.s32.totalorder %s102, %s103
      %p114 = scmp.eq.s32.totalorder %s17, 0
      %p115 = por %p113, %p114
      %p116 = scmp.ne.s32.totalorder %s102, %s103
      %p117 = scmp.eq.s32.totalorder %s18, 1
      %p118 = por %p116, %p117
      %p120 = scmp.ne.s32.totalorder %s103, %s119
      %p121 = scmp.eq.s32.totalorder %s18, 0
      %p122 = por %p120, %p121
      %s123 = ssub.s32 %s19, %s38
      %s124 = ssub.s32 %s20, %s34
      %s125 = sor.u32 %s123, %s124
      %p126 = scmp.eq.s32.totalorder %s125, 0
      %s128 = sadd.s32 %s127, 1
      %s129 = scalar_select %p126, %s127, %s128
      %p132 = pneg %p126
      %p133 = scmp.eq.s32.totalorder %s12, 1
      %p134 = por %p132, %p133
      %p135 = scmp.ne.s32.totalorder %s127, %s130
      %p136 = scmp.eq.s32.totalorder %s12, 0
      %p137 = por %p135, %p136
      %p138 = scmp.ne.s32.totalorder %s127, %s130
      %p139 = scmp.eq.s32.totalorder %s17, 1
      %p140 = por %p138, %p139
      %p141 = scmp.ne.s32.totalorder %s130, %s131
      %p142 = scmp.eq.s32.totalorder %s17, 0
      %p143 = por %p141, %p142
      %p144 = scmp.ne.s32.totalorder %s130, %s131
      %p145 = scmp.eq.s32.totalorder %s18, 1
      %p146 = por %p144, %p145
      %p148 = scmp.ne.s32.totalorder %s131, %s147
      %p149 = scmp.eq.s32.totalorder %s18, 0
      %p150 = por %p148, %p149
      %p151 = scmp.le.s32.totalorder 1, %s12
      %p152 = scmp.lt.s32.totalorder %s12, 3
      %p153 = pnand %p151, %p152
      %p154 = pneg %p153
      // Predicated region
      $region9: #{_sdpa_jit.1} parent=5 // pred_check
        _
      $region10: #{_sdpa_jit.1} parent=5 // pred_check_branch
        %156 = sbr.rel (%p153) target = $region12
      $region11: #{_sdpa_jit.1} parent=5 // pred_region
        %s157 = ssub.s32 %s12, 1
      $region12: #{_sdpa_jit.1} parent=5 // pred_fallthru
        _
      %p158 = scmp.lt.s32.totalorder %s12, 2
      // Predicated region
      $region13: #{_sdpa_jit.1} parent=5 // pred_check
        %p159 = pneg %p158
      $region14: #{_sdpa_jit.1} parent=5 // pred_check_branch
        %161 = sbr.rel (%p159) target = $region16
      $region15: #{_sdpa_jit.1} parent=5 // pred_region
        // Predicated region
        $region17: #{_sdpa_jit.1} parent=15 // pred_check
          %p162 = pneg %p53
        $region18: #{_sdpa_jit.1} parent=15 // pred_check_branch
          %164 = sbr.rel (%p162) target = $region20
        $region19: #{_sdpa_jit.1} parent=15 // pred_region
          %s165 = smul.u32 4, %s19
          %p166 = scmp.lt.s32.totalorder %s165, 7
          %s167 = scalar_select %p166, %s165, 7
          %p168 = scmp.lt.s32.totalorder %s20, 0
          %s169 = scalar_select %p168, %s20, 0
          %s170 = sadd.s32 %s169, %s167
          %s171 = smul.addr %s170, 4
          %s172 = scalar_lea.vmem %s0, %s171
          %s173 = smul.u32 4, %s19
        $region20: #{_sdpa_jit.1} parent=15 // pred_fallthru
          _
        // Predicated region
        $region21: #{_sdpa_jit.1} parent=15 // pred_check
          %p174 = pneg %p81
        $region22: #{_sdpa_jit.1} parent=15 // pred_check_branch
          %176 = sbr.rel (%p174) target = $region24
        $region23: #{_sdpa_jit.1} parent=15 // pred_region
          %s177 = smul.u32 4, %s19
          %p178 = scmp.lt.s32.totalorder %s177, 7
          %s179 = scalar_select %p178, %s177, 7
          %p180 = scmp.lt.s32.totalorder %s21, 0
          %s181 = scalar_select %p180, %s21, 0
          %s182 = sadd.s32 %s181, %s179
          %s183 = smul.addr %s182, 4
          %s184 = scalar_lea.vmem %s1, %s183
          %s185 = smul.u32 4, %s19
        $region24: #{_sdpa_jit.1} parent=15 // pred_fallthru
          _
        // Predicated region
        $region25: #{_sdpa_jit.1} parent=15 // pred_check
          %p186 = pneg %p109
        $region26: #{_sdpa_jit.1} parent=15 // pred_check_branch
          %188 = sbr.rel (%p186) target = $region28
        $region27: #{_sdpa_jit.1} parent=15 // pred_region
          %s189 = smul.u32 4, %s19
          %p190 = scmp.lt.s32.totalorder %s189, 7
          %s191 = scalar_select %p190, %s189, 7
          %p192 = scmp.lt.s32.totalorder %s21, 0
          %s193 = scalar_select %p192, %s21, 0
          %s194 = sadd.s32 %s193, %s191
          %s195 = smul.addr %s194, 4
          %s196 = scalar_lea.vmem %s2, %s195
          %s197 = smul.u32 4, %s19
        $region28: #{_sdpa_jit.1} parent=15 // pred_fallthru
          _
      $region16: #{_sdpa_jit.1} parent=5 // pred_fallthru
        _
      %p198 = scmp.le.s32.totalorder 1, %s12
      %p199 = scmp.lt.s32.totalorder %s12, 3
      %p200 = pnand %p198, %p199
      %p201 = pneg %p200
      // Predicated region
      $region29: #{_sdpa_jit.1} parent=5 // pred_check
        _
      $region30: #{_sdpa_jit.1} parent=5 // pred_check_branch
        %203 = sbr.rel (%p200) target = $region32
      $region31: #{_sdpa_jit.1} parent=5 // pred_region
        %s204 = ssub.s32 %s12, 1
        %s205 = smul.u32 4, %s22
        %p206 = scmp.lt.s32.totalorder %s205, 7
        %s207 = scalar_select %p206, %s205, 7
        %p208 = scmp.lt.s32.totalorder %s23, 0
        %s209 = scalar_select %p208, %s23, 0
        %s210 = sadd.s32 %s209, %s207
        %s211 = smul.addr %s210, 4
        %s212 = scalar_lea.vmem %s0, %s211
        %p213 = pneg %p59
        %p214 = pneg %p56
        %s215 = smul.u32 4, %s22
        %p216 = scmp.lt.s32.totalorder %s215, 7
        %s217 = scalar_select %p216, %s215, 7
        %p218 = scmp.lt.s32.totalorder %s24, 0
        %s219 = scalar_select %p218, %s24, 0
        %s220 = sadd.s32 %s219, %s217
        %s221 = smul.addr %s220, 4
        %s222 = scalar_lea.vmem %s1, %s221
        %p223 = pneg %p87
        %p224 = pneg %p84
        %s225 = smul.u32 4, %s22
        %p226 = scmp.lt.s32.totalorder %s225, 7
        %s227 = scalar_select %p226, %s225, 7
        %p228 = scmp.lt.s32.totalorder %s24, 0
        %s229 = scalar_select %p228, %s24, 0
        %s230 = sadd.s32 %s229, %s227
        %s231 = smul.addr %s230, 4
        %s232 = scalar_lea.vmem %s2, %s231
        %p233 = pneg %p115
        %p234 = pneg %p112
        %p235 = pneg %p143
        %p236 = pneg %p140
        %s237 = sand.u32 %s130, 1
        %s238 = scalar_lea.sflag [#allocation6], %s237
        %s239 = sand.u32 %s130, 1
        %s240 = smul.addr %s239, 32
        %s241 = scalar_lea.vmem [#allocation5], %s240
        %s242 = smul.u32 4, %s22
        %p243 = scmp.lt.s32.totalorder %s242, 7
        %s244 = scalar_select %p243, %s242, 7
        %p245 = scmp.lt.s32.totalorder %s23, 0
        %s246 = scalar_select %p245, %s23, 0
        %s247 = sadd.s32 %s246, %s244
        %s248 = smul.addr %s247, 4
        %s249 = scalar_lea.vmem %s0, %s248
        %s250 = smul.u32 4, %s22
        %s251 = smul.u32 4, %s22
        %p252 = scmp.lt.s32.totalorder %s251, 7
        %s253 = scalar_select %p252, %s251, 7
        %p254 = scmp.lt.s32.totalorder %s24, 0
        %s255 = scalar_select %p254, %s24, 0
        %s256 = sadd.s32 %s255, %s253
        %s257 = smul.addr %s256, 4
        %s258 = scalar_lea.vmem %s1, %s257
        %s259 = smul.u32 4, %s22
        %s260 = smul.u32 4, %s22
        %p261 = scmp.lt.s32.totalorder %s260, 7
        %s262 = scalar_select %p261, %s260, 7
        %p263 = scmp.lt.s32.totalorder %s24, 0
        %s264 = scalar_select %p263, %s24, 0
        %s265 = sadd.s32 %s264, %s262
        %s266 = smul.addr %s265, 4
        %s267 = scalar_lea.vmem %s2, %s266
        %s268 = smul.u32 4, %s22
        %s269 = smul.u32 4, %s22
        %v271 = vld [vmem:[%s249] sm:$0xf]
        %v272 = vld [vmem:[%s249 + $0x4] sm:$0xf]
        %v273 = vld [vmem:[%s249 + $0x8] sm:$0xf]
        %v274 = vld [vmem:[%s249 + $0xc] sm:$0xf]
        %v275 = vld [vmem:[%s258] sm:$0xf]
        %v276 = vld [vmem:[%s258 + $0x4] sm:$0xf]
        %v277 = vld [vmem:[%s258 + $0x8] sm:$0xf]
        %v278 = vld [vmem:[%s258 + $0xc] sm:$0xf]
        %v279 = vld [vmem:[%s267] sm:$0xf]
        %v280 = vld [vmem:[%s267 + $0x4] sm:$0xf]
        %v281 = vld [vmem:[%s267 + $0x8] sm:$0xf]
        %v282 = vld [vmem:[%s267 + $0xc] sm:$0xf]
        %p283 = scmp.eq.s32.totalorder %s24, 0
        // Predicated region
        $region33: #{_sdpa_jit.1} parent=31 // pred_check
          %p284 = pneg %p283
        $region34: #{_sdpa_jit.1} parent=31 // pred_check_branch
          %286 = sbr.rel (%p284) target = $region36
        $region35: #{_sdpa_jit.1} parent=31 // pred_region
          %vm287 = vcmask 7168
          %288 = vst.msk [vmem:[#allocation2] sm:$0xff] %vm287, -inf
          %289 = vst.msk [vmem:[#allocation2 + $0x8] sm:$0xff] %vm287, -inf
          %290 = vst.msk [vmem:[#allocation2 + $0x10] sm:$0xff] %vm287, -inf
          %291 = vst.msk [vmem:[#allocation2 + $0x18] sm:$0xff] %vm287, -inf
          %292 = vst.msk [vmem:[#allocation3] sm:$0xff] %vm287, 0.0
          %293 = vst.msk [vmem:[#allocation3 + $0x8] sm:$0xff] %vm287, 0.0
          %294 = vst.msk [vmem:[#allocation3 + $0x10] sm:$0xff] %vm287, 0.0
          %295 = vst.msk [vmem:[#allocation3 + $0x18] sm:$0xff] %vm287, 0.0
          %vm296 = vcmask 261120
          %297 = vst.msk [vmem:[#allocation4] sm:$0xff] %vm296, 0.0
          %298 = vst.msk [vmem:[#allocation4 + $0x8] sm:$0xff] %vm296, 0.0
          %299 = vst.msk [vmem:[#allocation4 + $0x10] sm:$0xff] %vm296, 0.0
          %300 = vst.msk [vmem:[#allocation4 + $0x18] sm:$0xff] %vm296, 0.0
        $region36: #{_sdpa_jit.1} parent=31 // pred_fallthru
          _
        %vm301 = vcmask 261120
        %v303 = vsel %vm301, %v271, 0
        %v306 = vsel %vm301, %v275, 0
        %308 = vmatprep.subr.bf16.mxu0 0
        %309 = vmatpush1.bf16.xpose.msra.mxu0 %v306
        %310 = vmatprep.subr.bf16.mxu0 0
        %311 = vmatpush1.bf16.xpose.msra.mxu0 0
        %312 = vmatprep.subr.bf16.mxu0 0
        %313 = vmatpush1.bf16.xpose.msra.mxu0 0
        %314 = vmatprep.subr.bf16.mxu0 0
        %315 = vmatpush1.bf16.xpose.msra.mxu0 0
        %316 = vmatprep.subr.bf16.mxu0 0
        %317 = vmatpush1.bf16.xpose.msra.mxu0 0
        %318 = vmatprep.subr.bf16.mxu0 0
        %319 = vmatpush1.bf16.xpose.msra.mxu0 0
        %320 = vmatprep.subr.bf16.mxu0 0
        %321 = vmatpush1.bf16.xpose.msra.mxu0 0
        %322 = vmatprep.subr.bf16.mxu0 0
        %323 = vmatpush1.bf16.xpose.msra.mxu0 0
        %324 = vmatprep.subr.bf16.mxu0 0
        %325 = vmatpush1.bf16.xpose.msra.mxu0 0
        %326 = vmatprep.subr.bf16.mxu0 0
        %327 = vmatpush1.bf16.xpose.msra.mxu0 0
        %328 = vmatprep.subr.bf16.mxu0 0
        %329 = vmatpush1.bf16.xpose.msra.mxu0 0
        %330 = vmatprep.subr.bf16.mxu0 0
        %331 = vmatpush1.bf16.xpose.msra.mxu0 0
        %332 = vmatprep.subr.bf16.mxu0 0
        %333 = vmatpush1.bf16.xpose.msra.mxu0 0
        %334 = vmatprep.subr.bf16.mxu0 0
        %335 = vmatpush1.bf16.xpose.msra.mxu0 0
        %336 = vmatprep.subr.bf16.mxu0 0
        %337 = vmatpush1.bf16.xpose.msra.mxu0 0
        %338 = vmatprep.subr.bf16.mxu0 0
        %339 = vmatpush1.bf16.xpose.msra.mxu0 0
        %340 = vmatprep.mubr.bf16.mxu0 0
        %341 = vmatmul.mubr.bf16.gmra.mrb[0].mxu0 %v303
        %v342 = vpop.f32.mrb[0].mxu0
        %v343 = vadd.f32 0.0, %v342
        %v344 = vpop.f32.mrb[0].mxu0
        %v345 = vpop.f32.mrb[0].mxu0
        %v346 = vpop.f32.mrb[0].mxu0
        %347 = vdwg.mxu0
        %v349 = vsel %vm301, %v272, 0
        %v352 = vsel %vm301, %v276, 0
        %354 = vmatprep.subr.bf16.mxu0 0
        %355 = vmatpush1.bf16.xpose.msra.mxu0 %v352
        %356 = vmatprep.subr.bf16.mxu0 0
        %357 = vmatpush1.bf16.xpose.msra.mxu0 0
        %358 = vmatprep.subr.bf16.mxu0 0
        %359 = vmatpush1.bf16.xpose.msra.mxu0 0
        %360 = vmatprep.subr.bf16.mxu0 0
        %361 = vmatpush1.bf16.xpose.msra.mxu0 0
        %362 = vmatprep.subr.bf16.mxu0 0
        %363 = vmatpush1.bf16.xpose.msra.mxu0 0
        %364 = vmatprep.subr.bf16.mxu0 0
        %365 = vmatpush1.bf16.xpose.msra.mxu0 0
        %366 = vmatprep.subr.bf16.mxu0 0
        %367 = vmatpush1.bf16.xpose.msra.mxu0 0
        %368 = vmatprep.subr.bf16.mxu0 0
        %369 = vmatpush1.bf16.xpose.msra.mxu0 0
        %370 = vmatprep.subr.bf16.mxu0 0
        %371 = vmatpush1.bf16.xpose.msra.mxu0 0
        %372 = vmatprep.subr.bf16.mxu0 0
        %373 = vmatpush1.bf16.xpose.msra.mxu0 0
        %374 = vmatprep.subr.bf16.mxu0 0
        %375 = vmatpush1.bf16.xpose.msra.mxu0 0
        %376 = vmatprep.subr.bf16.mxu0 0
        %377 = vmatpush1.bf16.xpose.msra.mxu0 0
        %378 = vmatprep.subr.bf16.mxu0 0
        %379 = vmatpush1.bf16.xpose.msra.mxu0 0
        %380 = vmatprep.subr.bf16.mxu0 0
        %381 = vmatpush1.bf16.xpose.msra.mxu0 0
        %382 = vmatprep.subr.bf16.mxu0 0
        %383 = vmatpush1.bf16.xpose.msra.mxu0 0
        %384 = vmatprep.subr.bf16.mxu0 0
        %385 = vmatpush1.bf16.xpose.msra.mxu0 0
        %386 = vmatprep.mubr.bf16.mxu0 0
        %387 = vmatmul.mubr.bf16.gmra.mrb[0].mxu0 %v349
        %v388 = vpop.f32.mrb[0].mxu0
        %v389 = vadd.f32 0.0, %v388
        %v390 = vpop.f32.mrb[0].mxu0
        %v391 = vpop.f32.mrb[0].mxu0
        %v392 = vpop.f32.mrb[0].mxu0
        %393 = vdwg.mxu0
        %v395 = vsel %vm301, %v273, 0
        %v398 = vsel %vm301, %v277, 0
        %400 = vmatprep.subr.bf16.mxu0 0
        %401 = vmatpush1.bf16.xpose.msra.mxu0 %v398
        %402 = vmatprep.subr.bf16.mxu0 0
        %403 = vmatpush1.bf16.xpose.msra.mxu0 0
        %404 = vmatprep.subr.bf16.mxu0 0
        %405 = vmatpush1.bf16.xpose.msra.mxu0 0
        %406 = vmatprep.subr.bf16.mxu0 0
        %407 = vmatpush1.bf16.xpose.msra.mxu0 0
        %408 = vmatprep.subr.bf16.mxu0 0
        %409 = vmatpush1.bf16.xpose.msra.mxu0 0
        %410 = vmatprep.subr.bf16.mxu0 0
        %411 = vmatpush1.bf16.xpose.msra.mxu0 0
        %412 = vmatprep.subr.bf16.mxu0 0
        %413 = vmatpush1.bf16.xpose.msra.mxu0 0
        %414 = vmatprep.subr.bf16.mxu0 0
        %415 = vmatpush1.bf16.xpose.msra.mxu0 0
        %416 = vmatprep.subr.bf16.mxu0 0
        %417 = vmatpush1.bf16.xpose.msra.mxu0 0
        %418 = vmatprep.subr.bf16.mxu0 0
        %419 = vmatpush1.bf16.xpose.msra.mxu0 0
        %420 = vmatprep.subr.bf16.mxu0 0
        %421 = vmatpush1.bf16.xpose.msra.mxu0 0
        %422 = vmatprep.subr.bf16.mxu0 0
        %423 = vmatpush1.bf16.xpose.msra.mxu0 0
        %424 = vmatprep.subr.bf16.mxu0 0
        %425 = vmatpush1.bf16.xpose.msra.mxu0 0
        %426 = vmatprep.subr.bf16.mxu0 0
        %427 = vmatpush1.bf16.xpose.msra.mxu0 0
        %428 = vmatprep.subr.bf16.mxu0 0
        %429 = vmatpush1.bf16.xpose.msra.mxu0 0
        %430 = vmatprep.subr.bf16.mxu0 0
        %431 = vmatpush1.bf16.xpose.msra.mxu0 0
        %432 = vmatprep.mubr.bf16.mxu0 0
        %433 = vmatmul.mubr.bf16.gmra.mrb[0].mxu0 %v395
        %v434 = vpop.f32.mrb[0].mxu0
        %v435 = vadd.f32 0.0, %v434
        %v436 = vpop.f32.mrb[0].mxu0
        %v437 = vpop.f32.mrb[0].mxu0
        %v438 = vpop.f32.mrb[0].mxu0
        %439 = vdwg.mxu0
        %v441 = vsel %vm301, %v274, 0
        %v444 = vsel %vm301, %v278, 0
        %446 = vmatprep.subr.bf16.mxu0 0
        %447 = vmatpush1.bf16.xpose.msra.mxu0 %v444
        %448 = vmatprep.subr.bf16.mxu0 0
        %449 = vmatpush1.bf16.xpose.msra.mxu0 0
        %450 = vmatprep.subr.bf16.mxu0 0
        %451 = vmatpush1.bf16.xpose.msra.mxu0 0
        %452 = vmatprep.subr.bf16.mxu0 0
        %453 = vmatpush1.bf16.xpose.msra.mxu0 0
        %454 = vmatprep.subr.bf16.mxu0 0
        %455 = vmatpush1.bf16.xpose.msra.mxu0 0
        %456 = vmatprep.subr.bf16.mxu0 0
        %457 = vmatpush1.bf16.xpose.msra.mxu0 0
        %458 = vmatprep.subr.bf16.mxu0 0
        %459 = vmatpush1.bf16.xpose.msra.mxu0 0
        %460 = vmatprep.subr.bf16.mxu0 0
        %461 = vmatpush1.bf16.xpose.msra.mxu0 0
        %462 = vmatprep.subr.bf16.mxu0 0
        %463 = vmatpush1.bf16.xpose.msra.mxu0 0
        %464 = vmatprep.subr.bf16.mxu0 0
        %465 = vmatpush1.bf16.xpose.msra.mxu0 0
        %466 = vmatprep.subr.bf16.mxu0 0
        %467 = vmatpush1.bf16.xpose.msra.mxu0 0
        %468 = vmatprep.subr.bf16.mxu0 0
        %469 = vmatpush1.bf16.xpose.msra.mxu0 0
        %470 = vmatprep.subr.bf16.mxu0 0
        %471 = vmatpush1.bf16.xpose.msra.mxu0 0
        %472 = vmatprep.subr.bf16.mxu0 0
        %473 = vmatpush1.bf16.xpose.msra.mxu0 0
        %474 = vmatprep.subr.bf16.mxu0 0
        %475 = vmatpush1.bf16.xpose.msra.mxu0 0
        %476 = vmatprep.subr.bf16.mxu0 0
        %477 = vmatpush1.bf16.xpose.msra.mxu0 0
        %478 = vmatprep.mubr.bf16.mxu0 0
        %479 = vmatmul.mubr.bf16.gmra.mrb[0].mxu0 %v441
        %v480 = vpop.f32.mrb[0].mxu0
        %v481 = vadd.f32 0.0, %v480
        %v482 = vpop.f32.mrb[0].mxu0
        %v483 = vpop.f32.mrb[0].mxu0
        %v484 = vpop.f32.mrb[0].mxu0
        %485 = vdwg.mxu0
        %v486 = vld [vmem:[#allocation2] sm:$0xff]
        %v487 = vld [vmem:[#allocation2 + $0x8] sm:$0xff]
        %v488 = vld [vmem:[#allocation2 + $0x10] sm:$0xff]
        %v489 = vld [vmem:[#allocation2 + $0x18] sm:$0xff]
        %vm490 = vcmask 64512
        %v491 = vsel %vm490, %v343, -inf
        %492 = vmax.xlane.f32.xlu0 %v491
        %v493 = vpop.xlane.xlu0 %492
        %v494 = vsel %vm490, %v389, -inf
        %495 = vmax.xlane.f32.xlu0 %v494
        %v496 = vpop.xlane.xlu0 %495
        %v497 = vsel %vm490, %v435, -inf
        %498 = vmax.xlane.f32.xlu0 %v497
        %v499 = vpop.xlane.xlu0 %498
        %v500 = vsel %vm490, %v481, -inf
        %501 = vmax.xlane.f32.xlu0 %v500
        %v502 = vpop.xlane.xlu0 %501
        %v503 = vmax.f32 %v486, %v493
        %v504 = vmax.f32 %v487, %v496
        %v505 = vmax.f32 %v488, %v499
        %v506 = vmax.f32 %v489, %v502
        %v507 = vsub.f32 %v486, %v503
        %v508 = vsub.f32 %v487, %v504
        %v509 = vsub.f32 %v488, %v505
        %v510 = vsub.f32 %v489, %v506
        %v511 = vmul.f32 %v507, 1.442695
        %v512 = vpow.pop %v511
        %v513 = vmul.f32 %v508, 1.442695
        %v514 = vpow.pop %v513
        %v515 = vmul.f32 %v509, 1.442695
        %v516 = vpow.pop %v515
        %v517 = vmul.f32 %v510, 1.442695
        %v518 = vpow.pop %v517
        %520 = vset.pattern.permute.xlu0 0
        %521 = vperm.xlu0 %520, %v503
        %v522 = vpop.permute.xlu0 %521
        %525 = vset.pattern.permute.xlu0 0
        %526 = vperm.xlu0 %525, %v504
        %v527 = vpop.permute.xlu0 %526
        %530 = vset.pattern.permute.xlu0 0
        %531 = vperm.xlu0 %530, %v505
        %v532 = vpop.permute.xlu0 %531
        %535 = vset.pattern.permute.xlu0 0
        %536 = vperm.xlu0 %535, %v506
        %v537 = vpop.permute.xlu0 %536
        %v539 = vsub.f32 %v343, %v522
        %v540 = vsub.f32 %v389, %v527
        %v541 = vsub.f32 %v435, %v532
        %v542 = vsub.f32 %v481, %v537
        %v543 = vmul.f32 %v539, 1.442695
        %v544 = vpow.pop %v543
        %v545 = vmul.f32 %v540, 1.442695
        %v546 = vpow.pop %v545
        %v547 = vmul.f32 %v541, 1.442695
        %v548 = vpow.pop %v547
        %v549 = vmul.f32 %v542, 1.442695
        %v550 = vpow.pop %v549
        %v551 = vld [vmem:[#allocation3] sm:$0xff]
        %v552 = vld [vmem:[#allocation3 + $0x8] sm:$0xff]
        %v553 = vld [vmem:[#allocation3 + $0x10] sm:$0xff]
        %v554 = vld [vmem:[#allocation3 + $0x18] sm:$0xff]
        %v555 = vmul.f32 %v512, %v551
        %v556 = vmul.f32 %v514, %v552
        %v557 = vmul.f32 %v516, %v553
        %v558 = vmul.f32 %v518, %v554
        %v559 = vsel %vm490, %v544, 0.0
        %560 = vadd.xlane.f32.xlu0 %v559
        %v561 = vpop.xlane.xlu0 %560
        %v562 = vsel %vm490, %v546, 0.0
        %563 = vadd.xlane.f32.xlu0 %v562
        %v564 = vpop.xlane.xlu0 %563
        %v565 = vsel %vm490, %v548, 0.0
        %566 = vadd.xlane.f32.xlu0 %v565
        %v567 = vpop.xlane.xlu0 %566
        %v568 = vsel %vm490, %v550, 0.0
        %569 = vadd.xlane.f32.xlu0 %v568
        %v570 = vpop.xlane.xlu0 %569
        %v571 = vadd.f32 %v555, %v561
        %v572 = vadd.f32 %v556, %v564
        %v573 = vadd.f32 %v557, %v567
        %v574 = vadd.f32 %v558, %v570
        %vm575 = vcmask 7168
        %576 = vst.msk [vmem:[#allocation3] sm:$0xff] %vm575, %v571
        %577 = vst.msk [vmem:[#allocation3 + $0x8] sm:$0xff] %vm575, %v572
        %578 = vst.msk [vmem:[#allocation3 + $0x10] sm:$0xff] %vm575, %v573
        %579 = vst.msk [vmem:[#allocation3 + $0x18] sm:$0xff] %vm575, %v574
        %v580 = vld [vmem:[#allocation4] sm:$0xff]
        %v581 = vld [vmem:[#allocation4 + $0x8] sm:$0xff]
        %v582 = vld [vmem:[#allocation4 + $0x10] sm:$0xff]
        %v583 = vld [vmem:[#allocation4 + $0x18] sm:$0xff]
        %585 = vset.pattern.permute.xlu0 0
        %586 = vperm.xlu0 %585, %v512
        %v587 = vpop.permute.xlu0 %586
        %590 = vset.pattern.permute.xlu0 0
        %591 = vperm.xlu0 %590, %v514
        %v592 = vpop.permute.xlu0 %591
        %595 = vset.pattern.permute.xlu0 0
        %596 = vperm.xlu0 %595, %v516
        %v597 = vpop.permute.xlu0 %596
        %600 = vset.pattern.permute.xlu0 0
        %601 = vperm.xlu0 %600, %v518
        %v602 = vpop.permute.xlu0 %601
        %v604 = vmul.f32 %v587, %v580
        %v605 = vmul.f32 %v592, %v581
        %v606 = vmul.f32 %v597, %v582
        %v607 = vmul.f32 %v602, %v583
        %v608 = vpack.c.bf16 %v544, %v544
        %v609 = vpack.c.bf16 %v546, %v546
        %v610 = vpack.c.bf16 %v548, %v548
        %v611 = vpack.c.bf16 %v550, %v550
        %v613 = vsel %vm490, %v608, 0
        %vm615 = vcmask 1043456
        %v617 = vsel %vm615, %v279, 0
        %619 = vmatprep.subr.bf16.mxu0 0
        %620 = vmatpush1.bf16.msra.mxu0 %v617
        %621 = vmatprep.subr.bf16.mxu0 0
        %622 = vmatpush1.bf16.msra.mxu0 0
        %623 = vmatprep.subr.bf16.mxu0 0
        %624 = vmatpush1.bf16.msra.mxu0 0
        %625 = vmatprep.subr.bf16.mxu0 0
        %626 = vmatpush1.bf16.msra.mxu0 0
        %627 = vmatprep.subr.bf16.mxu0 0
        %628 = vmatpush1.bf16.msra.mxu0 0
        %629 = vmatprep.subr.bf16.mxu0 0
        %630 = vmatpush1.bf16.msra.mxu0 0
        %631 = vmatprep.subr.bf16.mxu0 0
        %632 = vmatpush1.bf16.msra.mxu0 0
        %633 = vmatprep.subr.bf16.mxu0 0
        %634 = vmatpush1.bf16.msra.mxu0 0
        %635 = vmatprep.subr.bf16.mxu0 0
        %636 = vmatpush1.bf16.msra.mxu0 0
        %637 = vmatprep.subr.bf16.mxu0 0
        %638 = vmatpush1.bf16.msra.mxu0 0
        %639 = vmatprep.subr.bf16.mxu0 0
        %640 = vmatpush1.bf16.msra.mxu0 0
        %641 = vmatprep.subr.bf16.mxu0 0
        %642 = vmatpush1.bf16.msra.mxu0 0
        %643 = vmatprep.subr.bf16.mxu0 0
        %644 = vmatpush1.bf16.msra.mxu0 0
        %645 = vmatprep.subr.bf16.mxu0 0
        %646 = vmatpush1.bf16.msra.mxu0 0
        %647 = vmatprep.subr.bf16.mxu0 0
        %648 = vmatpush1.bf16.msra.mxu0 0
        %649 = vmatprep.subr.bf16.mxu0 0
        %650 = vmatpush1.bf16.msra.mxu0 0
        %651 = vmatprep.mubr.bf16.mxu0 0
        %652 = vmatmul.mubr.bf16.gmra.mrb[0].mxu0 %v613
        %v653 = vpop.f32.mrb[0].mxu0
        %v654 = vadd.f32 0.0, %v653
        %v655 = vpop.f32.mrb[0].mxu0
        %v656 = vpop.f32.mrb[0].mxu0
        %v657 = vpop.f32.mrb[0].mxu0
        %658 = vdwg.mxu0
        %v660 = vsel %vm490, %v609, 0
        %v663 = vsel %vm615, %v280, 0
        %665 = vmatprep.subr.bf16.mxu0 0
        %666 = vmatpush1.bf16.msra.mxu0 %v663
        %667 = vmatprep.subr.bf16.mxu0 0
        %668 = vmatpush1.bf16.msra.mxu0 0
        %669 = vmatprep.subr.bf16.mxu0 0
        %670 = vmatpush1.bf16.msra.mxu0 0
        %671 = vmatprep.subr.bf16.mxu0 0
        %672 = vmatpush1.bf16.msra.mxu0 0
        %673 = vmatprep.subr.bf16.mxu0 0
        %674 = vmatpush1.bf16.msra.mxu0 0
        %675 = vmatprep.subr.bf16.mxu0 0
        %676 = vmatpush1.bf16.msra.mxu0 0
        %677 = vmatprep.subr.bf16.mxu0 0
        %678 = vmatpush1.bf16.msra.mxu0 0
        %679 = vmatprep.subr.bf16.mxu0 0
        %680 = vmatpush1.bf16.msra.mxu0 0
        %681 = vmatprep.subr.bf16.mxu0 0
        %682 = vmatpush1.bf16.msra.mxu0 0
        %683 = vmatprep.subr.bf16.mxu0 0
        %684 = vmatpush1.bf16.msra.mxu0 0
        %685 = vmatprep.subr.bf16.mxu0 0
        %686 = vmatpush1.bf16.msra.mxu0 0
        %687 = vmatprep.subr.bf16.mxu0 0
        %688 = vmatpush1.bf16.msra.mxu0 0
        %689 = vmatprep.subr.bf16.mxu0 0
        %690 = vmatpush1.bf16.msra.mxu0 0
        %691 = vmatprep.subr.bf16.mxu0 0
        %692 = vmatpush1.bf16.msra.mxu0 0
        %693 = vmatprep.subr.bf16.mxu0 0
        %694 = vmatpush1.bf16.msra.mxu0 0
        %695 = vmatprep.subr.bf16.mxu0 0
        %696 = vmatpush1.bf16.msra.mxu0 0
        %697 = vmatprep.mubr.bf16.mxu0 0
        %698 = vmatmul.mubr.bf16.gmra.mrb[0].mxu0 %v660
        %v699 = vpop.f32.mrb[0].mxu0
        %v700 = vadd.f32 0.0, %v699
        %v701 = vpop.f32.mrb[0].mxu0
        %v702 = vpop.f32.mrb[0].mxu0
        %v703 = vpop.f32.mrb[0].mxu0
        %704 = vdwg.mxu0
        %v706 = vsel %vm490, %v610, 0
        %v709 = vsel %vm615, %v281, 0
        %711 = vmatprep.subr.bf16.mxu0 0
        %712 = vmatpush1.bf16.msra.mxu0 %v709
        %713 = vmatprep.subr.bf16.mxu0 0
        %714 = vmatpush1.bf16.msra.mxu0 0
        %715 = vmatprep.subr.bf16.mxu0 0
        %716 = vmatpush1.bf16.msra.mxu0 0
        %717 = vmatprep.subr.bf16.mxu0 0
        %718 = vmatpush1.bf16.msra.mxu0 0
        %719 = vmatprep.subr.bf16.mxu0 0
        %720 = vmatpush1.bf16.msra.mxu0 0
        %721 = vmatprep.subr.bf16.mxu0 0
        %722 = vmatpush1.bf16.msra.mxu0 0
        %723 = vmatprep.subr.bf16.mxu0 0
        %724 = vmatpush1.bf16.msra.mxu0 0
        %725 = vmatprep.subr.bf16.mxu0 0
        %726 = vmatpush1.bf16.msra.mxu0 0
        %727 = vmatprep.subr.bf16.mxu0 0
        %728 = vmatpush1.bf16.msra.mxu0 0
        %729 = vmatprep.subr.bf16.mxu0 0
        %730 = vmatpush1.bf16.msra.mxu0 0
        %731 = vmatprep.subr.bf16.mxu0 0
        %732 = vmatpush1.bf16.msra.mxu0 0
        %733 = vmatprep.subr.bf16.mxu0 0
        %734 = vmatpush1.bf16.msra.mxu0 0
        %735 = vmatprep.subr.bf16.mxu0 0
        %736 = vmatpush1.bf16.msra.mxu0 0
        %737 = vmatprep.subr.bf16.mxu0 0
        %738 = vmatpush1.bf16.msra.mxu0 0
        %739 = vmatprep.subr.bf16.mxu0 0
        %740 = vmatpush1.bf16.msra.mxu0 0
        %741 = vmatprep.subr.bf16.mxu0 0
        %742 = vmatpush1.bf16.msra.mxu0 0
        %743 = vmatprep.mubr.bf16.mxu0 0
        %744 = vmatmul.mubr.bf16.gmra.mrb[0].mxu0 %v706
        %v745 = vpop.f32.mrb[0].mxu0
        %v746 = vadd.f32 0.0, %v745
        %v747 = vpop.f32.mrb[0].mxu0
        %v748 = vpop.f32.mrb[0].mxu0
        %v749 = vpop.f32.mrb[0].mxu0
        %750 = vdwg.mxu0
        %v752 = vsel %vm490, %v611, 0
        %v755 = vsel %vm615, %v282, 0
        %757 = vmatprep.subr.bf16.mxu0 0
        %758 = vmatpush1.bf16.msra.mxu0 %v755
        %759 = vmatprep.subr.bf16.mxu0 0
        %760 = vmatpush1.bf16.msra.mxu0 0
        %761 = vmatprep.subr.bf16.mxu0 0
        %762 = vmatpush1.bf16.msra.mxu0 0
        %763 = vmatprep.subr.bf16.mxu0 0
        %764 = vmatpush1.bf16.msra.mxu0 0
        %765 = vmatprep.subr.bf16.mxu0 0
        %766 = vmatpush1.bf16.msra.mxu0 0
        %767 = vmatprep.subr.bf16.mxu0 0
        %768 = vmatpush1.bf16.msra.mxu0 0
        %769 = vmatprep.subr.bf16.mxu0 0
        %770 = vmatpush1.bf16.msra.mxu0 0
        %771 = vmatprep.subr.bf16.mxu0 0
        %772 = vmatpush1.bf16.msra.mxu0 0
        %773 = vmatprep.subr.bf16.mxu0 0
        %774 = vmatpush1.bf16.msra.mxu0 0
        %775 = vmatprep.subr.bf16.mxu0 0
        %776 = vmatpush1.bf16.msra.mxu0 0
        %777 = vmatprep.subr.bf16.mxu0 0
        %778 = vmatpush1.bf16.msra.mxu0 0
        %779 = vmatprep.subr.bf16.mxu0 0
        %780 = vmatpush1.bf16.msra.mxu0 0
        %781 = vmatprep.subr.bf16.mxu0 0
        %782 = vmatpush1.bf16.msra.mxu0 0
        %783 = vmatprep.subr.bf16.mxu0 0
        %784 = vmatpush1.bf16.msra.mxu0 0
        %785 = vmatprep.subr.bf16.mxu0 0
        %786 = vmatpush1.bf16.msra.mxu0 0
        %787 = vmatprep.subr.bf16.mxu0 0
        %788 = vmatpush1.bf16.msra.mxu0 0
        %789 = vmatprep.mubr.bf16.mxu0 0
        %790 = vmatmul.mubr.bf16.gmra.mrb[0].mxu0 %v752
        %v791 = vpop.f32.mrb[0].mxu0
        %v792 = vadd.f32 0.0, %v791
        %v793 = vpop.f32.mrb[0].mxu0
        %v794 = vpop.f32.mrb[0].mxu0
        %v795 = vpop.f32.mrb[0].mxu0
        %796 = vdwg.mxu0
        %v797 = vadd.f32 %v604, %v654
        %v798 = vadd.f32 %v605, %v700
        %v799 = vadd.f32 %v606, %v746
        %v800 = vadd.f32 %v607, %v792
        %801 = vst.msk [vmem:[#allocation4] sm:$0xff] %vm301, %v797
        %802 = vst.msk [vmem:[#allocation4 + $0x8] sm:$0xff] %vm301, %v798
        %803 = vst.msk [vmem:[#allocation4 + $0x10] sm:$0xff] %vm301, %v799
        %804 = vst.msk [vmem:[#allocation4 + $0x18] sm:$0xff] %vm301, %v800
        %805 = vst.msk [vmem:[#allocation2] sm:$0xff] %vm575, %v503
        %806 = vst.msk [vmem:[#allocation2 + $0x8] sm:$0xff] %vm575, %v504
        %807 = vst.msk [vmem:[#allocation2 + $0x10] sm:$0xff] %vm575, %v505
        %808 = vst.msk [vmem:[#allocation2 + $0x18] sm:$0xff] %vm575, %v506
        // Predicated region
        $region37: #{_sdpa_jit.1} parent=31 // pred_check
          %p809 = pneg %p283
        $region38: #{_sdpa_jit.1} parent=31 // pred_check_branch
          %811 = sbr.rel (%p809) target = $region40
        $region39: #{_sdpa_jit.1} parent=31 // pred_region
          %v812 = vld [vmem:[#allocation3] sm:$0xff]
          %v813 = vld [vmem:[#allocation3 + $0x8] sm:$0xff]
          %v814 = vld [vmem:[#allocation3 + $0x10] sm:$0xff]
          %v815 = vld [vmem:[#allocation3 + $0x18] sm:$0xff]
          %v816 = vrcp.pop %v812
          %v817 = vrcp.pop %v813
          %v818 = vrcp.pop %v814
          %v819 = vrcp.pop %v815
          %v820 = vld [vmem:[#allocation4] sm:$0xff]
          %v821 = vld [vmem:[#allocation4 + $0x8] sm:$0xff]
          %v822 = vld [vmem:[#allocation4 + $0x10] sm:$0xff]
          %v823 = vld [vmem:[#allocation4 + $0x18] sm:$0xff]
          %825 = vset.pattern.permute.xlu0 0
          %826 = vperm.xlu0 %825, %v816
          %v827 = vpop.permute.xlu0 %826
          %830 = vset.pattern.permute.xlu0 0
          %831 = vperm.xlu0 %830, %v817
          %v832 = vpop.permute.xlu0 %831
          %835 = vset.pattern.permute.xlu0 0
          %836 = vperm.xlu0 %835, %v818
          %v837 = vpop.permute.xlu0 %836
          %840 = vset.pattern.permute.xlu0 0
          %841 = vperm.xlu0 %840, %v819
          %v842 = vpop.permute.xlu0 %841
          %v844 = vmul.f32 %v820, %v827
          %v845 = vmul.f32 %v821, %v832
          %v846 = vmul.f32 %v822, %v837
          %v847 = vmul.f32 %v823, %v842
          %848 = vst.msk [vmem:[%s241] sm:$0xff] %vm301, %v844
          %849 = vst.msk [vmem:[%s241 + $0x8] sm:$0xff] %vm301, %v845
          %850 = vst.msk [vmem:[%s241 + $0x10] sm:$0xff] %vm301, %v846
          %851 = vst.msk [vmem:[%s241 + $0x18] sm:$0xff] %vm301, %v847
        $region40: #{_sdpa_jit.1} parent=31 // pred_fallthru
          _
        %s852 = sand.u32 %s130, 1
        %s853 = scalar_lea.sflag [#allocation6], %s852
        %s854 = sand.u32 %s130, 1
        %s855 = smul.addr %s854, 32
        %s856 = scalar_lea.vmem [#allocation5], %s855
        // Predicated region
        $region41: #{_sdpa_jit.1} parent=31 // pred_check
          %p857 = pneg %p140
        $region42: #{_sdpa_jit.1} parent=31 // pred_check_branch
          %859 = sbr.rel (%p857) target = $region44
        $region43: #{_sdpa_jit.1} parent=31 // pred_region
          %s860 = smul.u32 4, %s22
          %s862 = ssub.s32 512, 512
          %863 = vsyncadd %s853, %s862
          %s864 = sadd.s32 %s23, %s860
          %s865 = smul.addr %s864, 128
          %s866 = scalar_lea.hbm %s3, %s865
          %s867 = sshll.u32 %s856, 4
          %s868 = int_to_ptr.vmem [resolvable:$true] %s867
          %873 = dma.vmem_to_hbm [thread:$0]  %s868, 512, %s866, %s853, 128, 128, 8
        $region44: #{_sdpa_jit.1} parent=31 // pred_fallthru
          _
      $region32: #{_sdpa_jit.1} parent=5 // pred_fallthru
        _
      %p874 = scmp.le.s32.totalorder 2, %s12
      // Predicated region
      $region45: #{_sdpa_jit.1} parent=5 // pred_check
        %p875 = pneg %p874
      $region46: #{_sdpa_jit.1} parent=5 // pred_check_branch
        %877 = sbr.rel (%p875) target = $region48
      $region47: #{_sdpa_jit.1} parent=5 // pred_region
        %s878 = ssub.s32 %s12, 2
        // Predicated region
        $region49: #{_sdpa_jit.1} parent=47 // pred_check
          %p879 = pneg %p146
        $region50: #{_sdpa_jit.1} parent=47 // pred_check_branch
          %881 = sbr.rel (%p879) target = $region52
        $region51: #{_sdpa_jit.1} parent=47 // pred_region
          %s882 = sand.u32 %s131, 1
          %s883 = scalar_lea.sflag [#allocation6], %s882
          %s884 = sand.u32 %s131, 1
          %s885 = smul.addr %s884, 32
          %s886 = scalar_lea.vmem [#allocation5], %s885
          %887 = dma.done %s883, 512
        $region52: #{_sdpa_jit.1} parent=47 // pred_fallthru
          _
      $region48: #{_sdpa_jit.1} parent=5 // pred_fallthru
        _
    $region6: #{_sdpa_jit.1} parent=1 // loop_footer
      %s16 = sadd.s32 1, %s12
    $region7: #{_sdpa_jit.1} parent=1 // loop_footer_branch
      %11 = sbr.rel target = $region3
    $region8: #{_sdpa_jit.1} parent=1 // loop_exit
      _
    %888 = vsyncpa [#allocation6], 1
    %s889 = scalar_lea.sflag [#allocation6], 1
    %890 = vsyncpa %s889, 1

</llo_original>
